<compile_context>
chip_gen: v6e
topology: v6e:2x2x1
jax: 0.10.0
libtpu: 0.0.40
codegen_flags: <defaults>
</compile_context>

<pallas_src>
import functools
import math

import jax
import jax.numpy as jnp
from jax.experimental import pallas as pl
from jax.experimental.pallas import tpu as pltpu

NEG_SLOPE = 0.01  # nn.LeakyReLU default negative_slope


def _round_up(x, m):
    return (x + m - 1) // m * m


# ---------------------------------------------------------------------------
# Pallas kernel 1: conv-as-GEMM, lane-dense output.
#   o(N, tile_m) = LeakyReLU( w(N, K) @ a(K, tile_m) + b(N, 1) )
# ---------------------------------------------------------------------------
def _conv_gemm_kernel(w_ref, b_ref, a_ref, o_ref, *, slope):
    acc = jnp.dot(w_ref[...], a_ref[...], preferred_element_type=jnp.float32)
    acc = acc + b_ref[...]                              # (N, tile_m) + (N, 1)
    acc = jnp.where(acc >= 0.0, acc, slope * acc)       # LeakyReLU in f32
    o_ref[...] = acc.astype(o_ref.dtype)


def conv_gemm(w, b, a, *, tile_m=256, slope=NEG_SLOPE, out_dtype=jnp.bfloat16):
    """w: (N, K) bf16, b: (N,) f32, a: (K, M) bf16 with M % tile_m == 0.
    Returns LeakyReLU(w @ a + b) as (N, M), M on the lane axis (lane-dense)."""
    N, K = w.shape
    K2, M = a.shape
    assert K == K2 and M % tile_m == 0
    kernel = functools.partial(_conv_gemm_kernel, slope=slope)
    return pl.pallas_call(
        kernel,
        out_shape=jax.ShapeDtypeStruct((N, M), out_dtype),
        grid_spec=pltpu.PrefetchScalarGridSpec(
            num_scalar_prefetch=0,
            grid=(M // tile_m,),
            in_specs=[
                pl.BlockSpec((N, K), lambda i: (0, 0)),       # weights resident
                pl.BlockSpec((N, 1), lambda i: (0, 0)),       # bias resident
                pl.BlockSpec((K, tile_m), lambda i: (0, i)),  # activations, tiled over M
            ],
            out_specs=pl.BlockSpec((N, tile_m), lambda i: (0, i)),
        ),
        compiler_params=pltpu.CompilerParams(
            dimension_semantics=("parallel",),   # megacore sharding on v7x
        ),
    )(w, b.reshape(N, 1).astype(jnp.float32), a)


# ---------------------------------------------------------------------------
# Pallas kernel 2: fused FC (MLP) stack, all layers in one pallas_call.
# refs = (x_ref, w1, b1, w2, b2, ..., o_ref); hidden layers get LeakyReLU.
# ---------------------------------------------------------------------------
def _fc_stack_kernel(*refs, n_layers, slope):
    x_ref, o_ref = refs[0], refs[-1]
    h = x_ref[...]                                      # bf16 (tile_b, F)
    for li in range(n_layers):
        w_ref = refs[1 + 2 * li]
        b_ref = refs[2 + 2 * li]
        acc = jnp.dot(h, w_ref[...], preferred_element_type=jnp.float32)
        acc = acc + b_ref[...]                          # (tile_b, n) + (1, n)
        if li < n_layers - 1:
            acc = jnp.where(acc >= 0.0, acc, slope * acc)
            h = acc.astype(jnp.bfloat16)
        else:
            h = acc                                     # final layer: linear
    o_ref[...] = h.astype(o_ref.dtype)


def fc_stack(x, layers, *, slope=NEG_SLOPE):
    """x: (B, F).  layers: list of (w (in, out) bf16, b (out,) f32).
    Hidden layers use LeakyReLU; final layer is linear.  Returns (B, out) f32."""
    B, F = x.shape
    n_out = layers[-1][0].shape[1]
    tile_b = 256 if B >= 256 else _round_up(B, 8)
    B_pad = _round_up(B, tile_b)
    if B_pad != B:
        x = jnp.pad(x, ((0, B_pad - B), (0, 0)))

    inputs = [x.astype(jnp.bfloat16)]
    in_specs = [pl.BlockSpec((tile_b, F), lambda i: (i, 0))]
    for (w, b) in layers:
        inputs.append(w.astype(jnp.bfloat16))
        inputs.append(b.reshape(1, -1).astype(jnp.float32))
        in_specs.append(pl.BlockSpec(w.shape, lambda i: (0, 0)))        # resident
        in_specs.append(pl.BlockSpec((1, b.shape[0]), lambda i: (0, 0)))

    kernel = functools.partial(_fc_stack_kernel, n_layers=len(layers), slope=slope)
    out = pl.pallas_call(
        kernel,
        out_shape=jax.ShapeDtypeStruct((B_pad, n_out), jnp.float32),
        grid_spec=pltpu.PrefetchScalarGridSpec(
            num_scalar_prefetch=0,
            grid=(B_pad // tile_b,),
            in_specs=in_specs,
            out_specs=pl.BlockSpec((tile_b, n_out), lambda i: (i, 0)),
        ),
        compiler_params=pltpu.CompilerParams(dimension_semantics=("parallel",)),
    )(*inputs)
    return out[:B]


# ---------------------------------------------------------------------------
# Glue: im2col in channel-first (C, B, H, W) layout -> (Cin*K*K, B*Ho*Wo).
# Row order (cin, kh, kw) matches torch weight.reshape(Cout, -1).
# ---------------------------------------------------------------------------
def im2col_cbhw(x, ksize):
    Cin, B, H, W = x.shape
    Ho, Wo = H - ksize + 1, W - ksize + 1
    cols = []
    for kh in range(ksize):
        for kw in range(ksize):
            cols.append(x[:, :, kh:kh + Ho, kw:kw + Wo])
    patches = jnp.stack(cols, axis=1)                  # (Cin, K*K, B, Ho, Wo)
    return patches.reshape(Cin * ksize * ksize, B * Ho * Wo), Ho, Wo


def conv_layer(x_cbhw, w_nk, b_n, *, ksize=3, tile_m=256):
    """x: (Cin, B, H, W) bf16 -> LeakyReLU(conv3x3) as (Cout, B, Ho, Wo) bf16."""
    Cin, B, H, W = x_cbhw.shape
    a, Ho, Wo = im2col_cbhw(x_cbhw, ksize)
    K, M = a.shape
    K_pad = _round_up(K, 8)                            # matches weight padding
    M_pad = _round_up(M, tile_m)
    a = jnp.pad(a, ((0, K_pad - K), (0, M_pad - M)))
    y = conv_gemm(w_nk, b_n, a, tile_m=tile_m)         # (Cout, M_pad)
    Cout = w_nk.shape[0]
    return y[:, :M].reshape(Cout, B, Ho, Wo)


# ---------------------------------------------------------------------------
# Glue: SPPooling (AvgPool2d per level, count_include_pad=True) + torch.flatten
# ---------------------------------------------------------------------------
def spp_pooling(x_cbhw, pool_sizes):
    C, B, H, W = x_cbhw.shape
    x = x_cbhw.astype(jnp.float32)
    feats = []
    for level in pool_sizes:
        h_wid = int(math.ceil(H / level))
        w_wid = int(math.ceil(W / level))
        h_pad = min(int((h_wid * level - H + 1) / 2), h_wid // 2)
        w_pad = min(int((w_wid * level - W + 1) / 2), w_wid // 2)
        xp = jnp.pad(x, ((0, 0), (0, 0), (h_pad, h_pad), (w_pad, w_pad)))
        Hp, Wp = H + 2 * h_pad, W + 2 * w_pad
        oh = (Hp - h_wid) // h_wid + 1
        ow = (Wp - w_wid) // w_wid + 1
        xp = xp[:, :, :oh * h_wid, :ow * w_wid]
        pooled = xp.reshape(C, B, oh, h_wid, ow, w_wid).mean(axis=(3, 5))  # (C,B,oh,ow)
        # torch.flatten(pool(x_nchw), 1): per batch -> channel-major (c, ph, pw)
        feats.append(jnp.transpose(pooled, (1, 0, 2, 3)).reshape(B, C * oh * ow))
    return jnp.concatenate(feats, axis=1)


# ---------------------------------------------------------------------------
# Parameters (PyTorch-shaped, repacked/padded for the Pallas kernels)
# ---------------------------------------------------------------------------
def init_params(key, input_shape, channels, pooling_size, fc_shape, fc_output,
                ksize=3):
    cin = input_shape[0]
    assert cin == 1, "CnnSPP's first layer is nn.Conv2d(1, channels[0], 3)"
    params = {"conv": [], "fc": []}
    chans = [1] + list(channels)
    for idx in range(len(channels)):
        key, k1, k2 = jax.random.split(key, 3)
        ci, co = chans[idx], chans[idx + 1]
        fan_in = ci * ksize * ksize
        bound = 1.0 / math.sqrt(fan_in)
        w_pt = jax.random.uniform(k1, (co, ci, ksize, ksize), jnp.float32,
                                  -bound, bound)          # torch (Cout,Cin,KH,KW)
        b = jax.random.uniform(k2, (co,), jnp.float32, -bound, bound)
        w_flat = w_pt.reshape(co, ci * ksize * ksize)     # (Cout, Cin*KH*KW)
        K = ci * ksize * ksize
        K_pad = _round_up(K, 8)
        w_flat = jnp.pad(w_flat, ((0, 0), (0, K_pad - K))).astype(jnp.bfloat16)
        params["conv"].append((w_flat, b))

    num_feat = sum(channels[-1] * l * l for l in pooling_size)
    dims = [num_feat] + list(fc_shape) + [fc_output]
    for i in range(len(dims) - 1):
        key, k1, k2 = jax.random.split(key, 3)
        bound = 1.0 / math.sqrt(dims[i])
        w_pt = jax.random.uniform(k1, (dims[i + 1], dims[i]), jnp.float32,
                                  -bound, bound)          # torch (out, in)
        b = jax.random.uniform(k2, (dims[i + 1],), jnp.float32, -bound, bound)
        params["fc"].append((w_pt.T.astype(jnp.bfloat16), b))   # store (in, out)
    return params


# ---------------------------------------------------------------------------
# Forward (matches CnnSPP.forward semantics)
# ---------------------------------------------------------------------------
def cnn_spp_forward(x, params, input_shape, pooling_size, *, ksize=3, tile_m=256):
    cin, H, W = input_shape
    x = x.reshape(-1, cin, H, W)                       # x.view(-1, C, H, W)
    x = jnp.transpose(x, (1, 0, 2, 3))                 # NCHW -> (C, B, H, W)
    x = x.astype(jnp.bfloat16)                         # bf16 at the kernel boundary

    for (w_flat, b) in params["conv"]:                 # conv_module
        x = conv_layer(x, w_flat, b, ksize=ksize, tile_m=tile_m)

    feats = spp_pooling(x, pooling_size)               # pooling + flatten (f32)
    return fc_stack(feats, params["fc"])               # MLP head (single kernel)


if __name__ == "__main__":
    # Small, shape-consistent config:
    #   input_shape=(1, 16, 16), channels=[8, 16], pooling_size=[1, 2, 4]
    #   conv1: 16->14, conv2: 14->12; SPP feats = 16*(1+4+16) = 336
    input_shape = (1, 16, 16)
    channels = [8, 16]
    pooling_size = (1, 2, 4)
    fc_shape = [32]
    fc_output = 8
    batch = 2

    key = jax.random.PRNGKey(0)
    kp, kx = jax.random.split(key)
    params = init_params(kp, input_shape, channels, pooling_size, fc_shape,
                         fc_output)
    x = jax.random.normal(kx, (batch,) + input_shape, jnp.float32)  # NCHW

    fwd = jax.jit(lambda inp: cnn_spp_forward(inp, params, input_shape,
                                              pooling_size))
    out = fwd(x)
    out = jax.block_until_ready(out)

    assert out.shape == (batch, fc_output), out.shape
    assert out.dtype == jnp.float32
    assert bool(jnp.all(jnp.isfinite(out)))
    print("KERNEL_OK")
</pallas_src>

<mosaic_0001>
module attributes {stable_mosaic.version = 11 : i64} {
  func.func @_conv_gemm_kernel(%arg0: i32, %arg1: memref<8x16xbf16, #tpu.memory_space<vmem>>, %arg2: memref<8x1xf32, #tpu.memory_space<vmem>>, %arg3: memref<16x256xbf16, #tpu.memory_space<vmem>>, %arg4: memref<8x256xbf16, #tpu.memory_space<vmem>>) attributes {dimension_semantics = [#tpu.dimension_semantics<parallel>], iteration_bounds = array<i64: 2>, scalar_prefetch = 0 : i64, scratch_operands = 0 : i64, tpu.core_type = #tpu.core_type<tc>, window_params = [{pipeline_mode = #tpu.pipeline_mode<synchronous>, transform_indices = @transform_0, window_bounds = array<i64: 8, 16>}, {pipeline_mode = #tpu.pipeline_mode<synchronous>, transform_indices = @transform_1, window_bounds = array<i64: 8, 1>}, {transform_indices = @transform_2, window_bounds = array<i64: 16, 256>}, {transform_indices = @transform_3, window_bounds = array<i64: 8, 256>}]} {
    %c0 = arith.constant 0 : index
    %c0_0 = arith.constant 0 : index
    %0 = vector.load %arg1[%c0, %c0_0] : memref<8x16xbf16, #tpu.memory_space<vmem>>, vector<8x16xbf16>
    %c0_1 = arith.constant 0 : index
    %c0_2 = arith.constant 0 : index
    %1 = vector.load %arg3[%c0_1, %c0_2] : memref<16x256xbf16, #tpu.memory_space<vmem>>, vector<16x256xbf16>
    %cst = arith.constant dense<0.000000e+00> : vector<8x256xf32>
    %2 = tpu.matmul %0, %1, %cst {dimension_numbers = #tpu.dot_dimension_numbers<[1], [0], [0], [1], [0, 0, 1, 1], [], []>} : vector<8x16xbf16>, vector<16x256xbf16>, vector<8x256xf32> -> vector<8x256xf32>
    %c0_3 = arith.constant 0 : index
    %c0_4 = arith.constant 0 : index
    %3 = vector.load %arg2[%c0_3, %c0_4] : memref<8x1xf32, #tpu.memory_space<vmem>>, vector<8x1xf32>
    %4 = vector.broadcast %3 : vector<8x1xf32> to vector<8x256xf32>
    %5 = arith.addf %2, %4 : vector<8x256xf32>
    %cst_5 = arith.constant 0.000000e+00 : f32
    %6 = vector.broadcast %cst_5 : f32 to vector<8x256xf32>
    %7 = arith.cmpf oge, %5, %6 : vector<8x256xf32>
    %cst_6 = arith.constant 0.00999999977 : f32
    %8 = vector.broadcast %cst_6 : f32 to vector<8x256xf32>
    %9 = arith.mulf %8, %5 : vector<8x256xf32>
    %10 = arith.select %7, %5, %9 : vector<8x256xi1>, vector<8x256xf32>
    %11 = arith.truncf %10 : vector<8x256xf32> to vector<8x256xbf16>
    %c0_7 = arith.constant 0 : index
    %c0_8 = arith.constant 0 : index
    %12 = vector.load %arg4[%c0_7, %c0_8] : memref<8x256xbf16, #tpu.memory_space<vmem>>, vector<8x256xbf16>
    tpu.vector_store %arg4[%c0_7, %c0_8], %11 {strides = array<i32>} : memref<8x256xbf16, #tpu.memory_space<vmem>>, vector<8x256xbf16>,
    return
  }
  func.func @transform_0(%arg0: i32) -> (i32, i32) {
    %c0_i32 = arith.constant 0 : i32
    %c0_i32_0 = arith.constant 0 : i32
    %c0_i32_1 = arith.constant 0 : i32
    return %c0_i32, %c0_i32_0 : i32, i32
  }
  func.func @transform_1(%arg0: i32) -> (i32, i32) {
    %c0_i32 = arith.constant 0 : i32
    %c0_i32_0 = arith.constant 0 : i32
    %c0_i32_1 = arith.constant 0 : i32
    return %c0_i32, %c0_i32_0 : i32, i32
  }
  func.func @transform_2(%arg0: i32) -> (i32, i32) {
    %c0_i32 = arith.constant 0 : i32
    %c0_i32_0 = arith.constant 0 : i32
    return %c0_i32, %arg0 : i32, i32
  }
  func.func @transform_3(%arg0: i32) -> (i32, i32) {
    %c0_i32 = arith.constant 0 : i32
    %c0_i32_0 = arith.constant 0 : i32
    return %c0_i32, %arg0 : i32, i32
  }
}

module attributes {stable_mosaic.version = 11 : i64} {
  func.func @_conv_gemm_kernel(%arg0: i32, %arg1: memref<16x72xbf16, #tpu.memory_space<vmem>>, %arg2: memref<16x1xf32, #tpu.memory_space<vmem>>, %arg3: memref<72x256xbf16, #tpu.memory_space<vmem>>, %arg4: memref<16x256xbf16, #tpu.memory_space<vmem>>) attributes {dimension_semantics = [#tpu.dimension_semantics<parallel>], iteration_bounds = array<i64: 2>, scalar_prefetch = 0 : i64, scratch_operands = 0 : i64, tpu.core_type = #tpu.core_type<tc>, window_params = [{pipeline_mode = #tpu.pipeline_mode<synchronous>, transform_indices = @transform_0, window_bounds = array<i64: 16, 72>}, {pipeline_mode = #tpu.pipeline_mode<synchronous>, transform_indices = @transform_1, window_bounds = array<i64: 16, 1>}, {transform_indices = @transform_2, window_bounds = array<i64: 72, 256>}, {transform_indices = @transform_3, window_bounds = array<i64: 16, 256>}]} {
    %c0 = arith.constant 0 : index
    %c0_0 = arith.constant 0 : index
    %0 = vector.load %arg1[%c0, %c0_0] : memref<16x72xbf16, #tpu.memory_space<vmem>>, vector<16x72xbf16>
    %c0_1 = arith.constant 0 : index
    %c0_2 = arith.constant 0 : index
    %1 = vector.load %arg3[%c0_1, %c0_2] : memref<72x256xbf16, #tpu.memory_space<vmem>>, vector<72x256xbf16>
    %cst = arith.constant dense<0.000000e+00> : vector<16x256xf32>
    %2 = tpu.matmul %0, %1, %cst {dimension_numbers = #tpu.dot_dimension_numbers<[1], [0], [0], [1], [0, 0, 1, 1], [], []>} : vector<16x72xbf16>, vector<72x256xbf16>, vector<16x256xf32> -> vector<16x256xf32>
    %c0_3 = arith.constant 0 : index
    %c0_4 = arith.constant 0 : index
    %3 = vector.load %arg2[%c0_3, %c0_4] : memref<16x1xf32, #tpu.memory_space<vmem>>, vector<16x1xf32>
    %4 = vector.broadcast %3 : vector<16x1xf32> to vector<16x256xf32>
    %5 = arith.addf %2, %4 : vector<16x256xf32>
    %cst_5 = arith.constant 0.000000e+00 : f32
    %6 = vector.broadcast %cst_5 : f32 to vector<16x256xf32>
    %7 = arith.cmpf oge, %5, %6 : vector<16x256xf32>
    %cst_6 = arith.constant 0.00999999977 : f32
    %8 = vector.broadcast %cst_6 : f32 to vector<16x256xf32>
    %9 = arith.mulf %8, %5 : vector<16x256xf32>
    %10 = arith.select %7, %5, %9 : vector<16x256xi1>, vector<16x256xf32>
    %11 = arith.truncf %10 : vector<16x256xf32> to vector<16x256xbf16>
    %c0_7 = arith.constant 0 : index
    %c0_8 = arith.constant 0 : index
    %12 = vector.load %arg4[%c0_7, %c0_8] : memref<16x256xbf16, #tpu.memory_space<vmem>>, vector<16x256xbf16>
    tpu.vector_store %arg4[%c0_7, %c0_8], %11 {strides = array<i32>} : memref<16x256xbf16, #tpu.memory_space<vmem>>, vector<16x256xbf16>,
    return
  }
  func.func @transform_0(%arg0: i32) -> (i32, i32) {
    %c0_i32 = arith.constant 0 : i32
    %c0_i32_0 = arith.constant 0 : i32
    %c0_i32_1 = arith.constant 0 : i32
    return %c0_i32, %c0_i32_0 : i32, i32
  }
  func.func @transform_1(%arg0: i32) -> (i32, i32) {
    %c0_i32 = arith.constant 0 : i32
    %c0_i32_0 = arith.constant 0 : i32
    %c0_i32_1 = arith.constant 0 : i32
    return %c0_i32, %c0_i32_0 : i32, i32
  }
  func.func @transform_2(%arg0: i32) -> (i32, i32) {
    %c0_i32 = arith.constant 0 : i32
    %c0_i32_0 = arith.constant 0 : i32
    return %c0_i32, %arg0 : i32, i32
  }
  func.func @transform_3(%arg0: i32) -> (i32, i32) {
    %c0_i32 = arith.constant 0 : i32
    %c0_i32_0 = arith.constant 0 : i32
    return %c0_i32, %arg0 : i32, i32
  }
}

module attributes {stable_mosaic.version = 11 : i64} {
  func.func @_fc_stack_kernel(%arg0: i32, %arg1: memref<8x336xbf16, #tpu.memory_space<vmem>>, %arg2: memref<336x32xbf16, #tpu.memory_space<vmem>>, %arg3: memref<1x32xf32, #tpu.memory_space<vmem>>, %arg4: memref<32x8xbf16, #tpu.memory_space<vmem>>, %arg5: memref<1x8xf32, #tpu.memory_space<vmem>>, %arg6: memref<8x8xf32, #tpu.memory_space<vmem>>) attributes {dimension_semantics = [#tpu.dimension_semantics<parallel>], iteration_bounds = array<i64: 1>, scalar_prefetch = 0 : i64, scratch_operands = 0 : i64, tpu.core_type = #tpu.core_type<tc>, window_params = [{transform_indices = @transform_0, window_bounds = array<i64: 8, 336>}, {pipeline_mode = #tpu.pipeline_mode<synchronous>, transform_indices = @transform_1, window_bounds = array<i64: 336, 32>}, {pipeline_mode = #tpu.pipeline_mode<synchronous>, transform_indices = @transform_2, window_bounds = array<i64: 1, 32>}, {pipeline_mode = #tpu.pipeline_mode<synchronous>, transform_indices = @transform_3, window_bounds = array<i64: 32, 8>}, {pipeline_mode = #tpu.pipeline_mode<synchronous>, transform_indices = @transform_4, window_bounds = array<i64: 1, 8>}, {transform_indices = @transform_5, window_bounds = array<i64: 8, 8>}]} {
    %c0 = arith.constant 0 : index
    %c0_0 = arith.constant 0 : index
    %0 = vector.load %arg1[%c0, %c0_0] : memref<8x336xbf16, #tpu.memory_space<vmem>>, vector<8x336xbf16>
    %c0_1 = arith.constant 0 : index
    %c0_2 = arith.constant 0 : index
    %1 = vector.load %arg2[%c0_1, %c0_2] : memref<336x32xbf16, #tpu.memory_space<vmem>>, vector<336x32xbf16>
    %cst = arith.constant dense<0.000000e+00> : vector<8x32xf32>
    %2 = tpu.matmul %0, %1, %cst {dimension_numbers = #tpu.dot_dimension_numbers<[1], [0], [0], [1], [0, 0, 1, 1], [], []>} : vector<8x336xbf16>, vector<336x32xbf16>, vector<8x32xf32> -> vector<8x32xf32>
    %c0_3 = arith.constant 0 : index
    %c0_4 = arith.constant 0 : index
    %3 = vector.load %arg3[%c0_3, %c0_4] : memref<1x32xf32, #tpu.memory_space<vmem>>, vector<1x32xf32>
    %4 = vector.broadcast %3 : vector<1x32xf32> to vector<8x32xf32>
    %5 = arith.addf %2, %4 : vector<8x32xf32>
    %cst_5 = arith.constant 0.000000e+00 : f32
    %6 = vector.broadcast %cst_5 : f32 to vector<8x32xf32>
    %7 = arith.cmpf oge, %5, %6 : vector<8x32xf32>
    %cst_6 = arith.constant 0.00999999977 : f32
    %8 = vector.broadcast %cst_6 : f32 to vector<8x32xf32>
    %9 = arith.mulf %8, %5 : vector<8x32xf32>
    %10 = arith.select %7, %5, %9 : vector<8x32xi1>, vector<8x32xf32>
    %11 = arith.truncf %10 : vector<8x32xf32> to vector<8x32xbf16>
    %c0_7 = arith.constant 0 : index
    %c0_8 = arith.constant 0 : index
    %12 = vector.load %arg4[%c0_7, %c0_8] : memref<32x8xbf16, #tpu.memory_space<vmem>>, vector<32x8xbf16>
    %cst_9 = arith.constant dense<0.000000e+00> : vector<8x8xf32>
    %13 = tpu.matmul %11, %12, %cst_9 {dimension_numbers = #tpu.dot_dimension_numbers<[1], [0], [0], [1], [0, 0, 1, 1], [], []>} : vector<8x32xbf16>, vector<32x8xbf16>, vector<8x8xf32> -> vector<8x8xf32>
    %c0_10 = arith.constant 0 : index
    %c0_11 = arith.constant 0 : index
    %14 = vector.load %arg5[%c0_10, %c0_11] : memref<1x8xf32, #tpu.memory_space<vmem>>, vector<1x8xf32>
    %15 = vector.broadcast %14 : vector<1x8xf32> to vector<8x8xf32>
    %16 = arith.addf %13, %15 : vector<8x8xf32>
    %c0_12 = arith.constant 0 : index
    %c0_13 = arith.constant 0 : index
    %17 = vector.load %arg6[%c0_12, %c0_13] : memref<8x8xf32, #tpu.memory_space<vmem>>, vector<8x8xf32>
    tpu.vector_store %arg6[%c0_12, %c0_13], %16 {strides = array<i32>} : memref<8x8xf32, #tpu.memory_space<vmem>>, vector<8x8xf32>,
    return
  }
  func.func @transform_0(%arg0: i32) -> (i32, i32) {
    %c0_i32 = arith.constant 0 : i32
    %c0_i32_0 = arith.constant 0 : i32
    return %arg0, %c0_i32 : i32, i32
  }
  func.func @transform_1(%arg0: i32) -> (i32, i32) {
    %c0_i32 = arith.constant 0 : i32
    %c0_i32_0 = arith.constant 0 : i32
    %c0_i32_1 = arith.constant 0 : i32
    return %c0_i32, %c0_i32_0 : i32, i32
  }
  func.func @transform_2(%arg0: i32) -> (i32, i32) {
    %c0_i32 = arith.constant 0 : i32
    %c0_i32_0 = arith.constant 0 : i32
    %c0_i32_1 = arith.constant 0 : i32
    return %c0_i32, %c0_i32_0 : i32, i32
  }
  func.func @transform_3(%arg0: i32) -> (i32, i32) {
    %c0_i32 = arith.constant 0 : i32
    %c0_i32_0 = arith.constant 0 : i32
    %c0_i32_1 = arith.constant 0 : i32
    return %c0_i32, %c0_i32_0 : i32, i32
  }
  func.func @transform_4(%arg0: i32) -> (i32, i32) {
    %c0_i32 = arith.constant 0 : i32
    %c0_i32_0 = arith.constant 0 : i32
    %c0_i32_1 = arith.constant 0 : i32
    return %c0_i32, %c0_i32_0 : i32, i32
  }
  func.func @transform_5(%arg0: i32) -> (i32, i32) {
    %c0_i32 = arith.constant 0 : i32
    %c0_i32_0 = arith.constant 0 : i32
    return %arg0, %c0_i32 : i32, i32
  }
}

</mosaic_0001>

<llo_original>
// kernel: _lambda_.3
$region0: #{_lambda_.3}
  #allocation0 [shape = 'u32[]', space=smem, size = 0x4, offset = 0x4, fixed_abs, tag = 'smem constant byte address 0x4 - core index']
  #allocation1 [shape = 'u32[144,128]{1,0:T(1,128)}', space=vmem, size = 0x12000, scoped, tag = 'internal scratch']
  %s0 = inlined_call_operand.vmem [shape: bf16[8,16], index: 0, kind: input, shape index: {}]
  %s1 = inlined_call_operand.vmem [shape: f32[8,1], index: 1, kind: input, shape index: {}]
  %s2 = inlined_call_operand.vmem [shape: bf16[16,512], index: 2, kind: input, shape index: {}]
  %s3 = inlined_call_operand.vmem [shape: bf16[8,512], index: 3, kind: output, shape index: {}]
  %s4 = sld [smem:[#allocation0]]
  $region83: #{_lambda_.3} parent=0
    _
  %s6 = ssub.s32 1, %s4
  %s7 = scalar_select 0, %s6, %s4
  $region1: #{_lambda_.3} parent=0
    #allocation2 [shape = 'u8[16384]{0}', space=vmem, size = 0x4000, scoped, tag = 'input window, operand 2']
    loop: start=0, step=1, limit=4
    $region2: #{_lambda_.3} parent=1 // loop_pre_header
      _
    $region3: #{_lambda_.3} parent=1 // loop_header
      %s9 = sphi 0, %s13
      %p10 = scmp.ge.s32.totalorder %s9, 4
      %s17 = sphi 0, %s17
      %s19 = sphi 0, %s17
      %s20 = sphi 0, %s19
      %s34 = sphi 0, %s20
      %s38 = sphi 0, %s38
      %s40 = sphi 0, %s38
      %s41 = sphi 0, %s40
      %s55 = sphi 0, %s41
      %s61 = sphi 0, %s63
      %s64 = sphi 0, %s61
      %s65 = sphi 0, %s64
      %s81 = sphi 0, %s65
      %s87 = sphi 0, %s89
      %s90 = sphi 0, %s87
      %s91 = sphi 0, %s90
      %s107 = sphi 0, %s91
    $region4: #{_lambda_.3} parent=1 // loop_header_branch
      %12 = sbr.rel (%p10) target = $region8
    $region5: #{_lambda_.3} parent=1 // loop_body
      %s14 = ssub.s32 %s9, 1
      %s15 = ssub.s32 %s9, 2
      %s16 = sadd.s32 %s9, 1
      %s18 = sadd.s32 %s17, 1
      %p21 = scmp.eq.s32.totalorder %s9, 1
      %p22 = scmp.ne.s32.totalorder %s17, %s19
      %p23 = scmp.eq.s32.totalorder %s9, 0
      %p24 = por %p22, %p23
      %p25 = scmp.ne.s32.totalorder %s17, %s19
      %p26 = scmp.eq.s32.totalorder %s14, 1
      %p27 = por %p25, %p26
      %p28 = scmp.ne.s32.totalorder %s19, %s20
      %p29 = scmp.eq.s32.totalorder %s14, 0
      %p30 = por %p28, %p29
      %p31 = scmp.ne.s32.totalorder %s19, %s20
      %p32 = scmp.eq.s32.totalorder %s15, 1
      %p33 = por %p31, %p32
      %p35 = scmp.ne.s32.totalorder %s20, %s34
      %p36 = scmp.eq.s32.totalorder %s15, 0
      %p37 = por %p35, %p36
      %s39 = sadd.s32 %s38, 1
      %p42 = scmp.eq.s32.totalorder %s9, 1
      %p43 = scmp.ne.s32.totalorder %s38, %s40
      %p44 = scmp.eq.s32.totalorder %s9, 0
      %p45 = por %p43, %p44
      %p46 = scmp.ne.s32.totalorder %s38, %s40
      %p47 = scmp.eq.s32.totalorder %s14, 1
      %p48 = por %p46, %p47
      %p49 = scmp.ne.s32.totalorder %s40, %s41
      %p50 = scmp.eq.s32.totalorder %s14, 0
      %p51 = por %p49, %p50
      %p52 = scmp.ne.s32.totalorder %s40, %s41
      %p53 = scmp.eq.s32.totalorder %s15, 1
      %p54 = por %p52, %p53
      %p56 = scmp.ne.s32.totalorder %s41, %s55
      %p57 = scmp.eq.s32.totalorder %s15, 0
      %p58 = por %p56, %p57
      %s59 = ssub.s32 %s9, %s16
      %p60 = scmp.eq.s32.totalorder %s59, 0
      %s62 = sadd.s32 %s61, 1
      %s63 = scalar_select %p60, %s61, %s62
      %p66 = pneg %p60
      %p67 = scmp.eq.s32.totalorder %s9, 1
      %p68 = por %p66, %p67
      %p69 = scmp.ne.s32.totalorder %s61, %s64
      %p70 = scmp.eq.s32.totalorder %s9, 0
      %p71 = por %p69, %p70
      %p72 = scmp.ne.s32.totalorder %s61, %s64
      %p73 = scmp.eq.s32.totalorder %s14, 1
      %p74 = por %p72, %p73
      %p75 = scmp.ne.s32.totalorder %s64, %s65
      %p76 = scmp.eq.s32.totalorder %s14, 0
      %p77 = por %p75, %p76
      %p78 = scmp.ne.s32.totalorder %s64, %s65
      %p79 = scmp.eq.s32.totalorder %s15, 1
      %p80 = por %p78, %p79
      %p82 = scmp.ne.s32.totalorder %s65, %s81
      %p83 = scmp.eq.s32.totalorder %s15, 0
      %p84 = por %p82, %p83
      %s85 = ssub.s32 %s9, %s16
      %p86 = scmp.eq.s32.totalorder %s85, 0
      %s88 = sadd.s32 %s87, 1
      %s89 = scalar_select %p86, %s87, %s88
      %p92 = pneg %p86
      %p93 = scmp.eq.s32.totalorder %s9, 1
      %p94 = por %p92, %p93
      %p95 = scmp.ne.s32.totalorder %s87, %s90
      %p96 = scmp.eq.s32.totalorder %s9, 0
      %p97 = por %p95, %p96
      %p98 = scmp.ne.s32.totalorder %s87, %s90
      %p99 = scmp.eq.s32.totalorder %s14, 1
      %p100 = por %p98, %p99
      %p101 = scmp.ne.s32.totalorder %s90, %s91
      %p102 = scmp.eq.s32.totalorder %s14, 0
      %p103 = por %p101, %p102
      %p104 = scmp.ne.s32.totalorder %s90, %s91
      %p105 = scmp.eq.s32.totalorder %s15, 1
      %p106 = por %p104, %p105
      %p108 = scmp.ne.s32.totalorder %s91, %s107
      %p109 = scmp.eq.s32.totalorder %s15, 0
      %p110 = por %p108, %p109
      %p111 = scmp.le.s32.totalorder 1, %s9
      %p112 = scmp.lt.s32.totalorder %s9, 3
      %p113 = pnand %p111, %p112
      %p114 = pneg %p113
      // Predicated region
      $region9: #{_lambda_.3} parent=5 // pred_check
        _
      $region10: #{_lambda_.3} parent=5 // pred_check_branch
        %116 = sbr.rel (%p113) target = $region12
      $region11: #{_lambda_.3} parent=5 // pred_region
        %s117 = ssub.s32 %s9, 1
        // Predicated region
        $region13: #{_lambda_.3} parent=11 // pred_check
          %p118 = pneg %p30
        $region14: #{_lambda_.3} parent=11 // pred_check_branch
          %120 = sbr.rel (%p118) target = $region16
        $region15: #{_lambda_.3} parent=11 // pred_region
          _
        $region16: #{_lambda_.3} parent=11 // pred_fallthru
          _
        // Predicated region
        $region17: #{_lambda_.3} parent=11 // pred_check
          %p121 = pneg %p51
        $region18: #{_lambda_.3} parent=11 // pred_check_branch
          %123 = sbr.rel (%p121) target = $region20
        $region19: #{_lambda_.3} parent=11 // pred_region
          _
        $region20: #{_lambda_.3} parent=11 // pred_fallthru
          _
      $region12: #{_lambda_.3} parent=5 // pred_fallthru
        _
      %p124 = scmp.lt.s32.totalorder %s9, 2
      // Predicated region
      $region21: #{_lambda_.3} parent=5 // pred_check
        %p125 = pneg %p124
      $region22: #{_lambda_.3} parent=5 // pred_check_branch
        %127 = sbr.rel (%p125) target = $region24
      $region23: #{_lambda_.3} parent=5 // pred_region
        // Predicated region
        $region25: #{_lambda_.3} parent=23 // pred_check
          %p128 = pneg %p71
        $region26: #{_lambda_.3} parent=23 // pred_check_branch
          %130 = sbr.rel (%p128) target = $region28
        $region27: #{_lambda_.3} parent=23 // pred_region
          %s131 = sand.u32 %s61, 1
          %s132 = sand.u32 %s61, 1
          %s133 = smul.addr %s132, 16
          %s134 = scalar_lea.vmem [#allocation2], %s133
          %s135 = smul.u32 2, %s9
          %s136 = smul.addr %s135, 4
          %s137 = scalar_lea.vmem %s2, %s136
          // Predicated region
          $region29: #{_lambda_.3} parent=27 // pred_check
            _
          $region30: #{_lambda_.3} parent=27 // pred_check_branch
            %139 = sbr.rel (0) target = $region32
          $region31: #{_lambda_.3} parent=27 // pred_region
            // Predicated region
            $region33: #{_lambda_.3} parent=31 // pred_check
              _
            $region34: #{_lambda_.3} parent=31 // pred_check_branch
              %141 = sbr.rel (0) target = $region36
            $region35: #{_lambda_.3} parent=31 // pred_region
              // Predicated region
              $region48: #{_lambda_.3} parent=35 // pred_check
                _
              $region49: #{_lambda_.3} parent=35 // pred_check_branch
                %159 = sbr.rel (0) target = $region51
              $region50: #{_lambda_.3} parent=35 // pred_region
                loop: start=0, step=1, limit=1
                $region52: #{_lambda_.3} parent=50 // loop_pre_header
                  _
                $region53: #{_lambda_.3} parent=50 // loop_header
                  %s161 = sphi 0, %s165
                  %p162 = scmp.ge.s32.totalorder %s161, 1
                  %s166 = sphi %s137, %s137
                  %s167 = sphi %s134, %s134
                $region54: #{_lambda_.3} parent=50 // loop_header_branch
                  %164 = sbr.rel (%p162) target = $region58
                $region55: #{_lambda_.3} parent=50 // loop_body
                  %v168 = vld [vmem:[%s166] sm:$0xff]
                  %169 = vst [vmem:[%s167] sm:$0xff] %v168
                  %v170 = vld [vmem:[%s166 + $0x10] sm:$0xff]
                  %171 = vst [vmem:[%s167 + $0x8] sm:$0xff] %v170
                $region56: #{_lambda_.3} parent=50 // loop_footer
                  %s165 = sadd.s32 1, %s161
                $region57: #{_lambda_.3} parent=50 // loop_footer_branch
                  %160 = sbr.rel target = $region53
                $region58: #{_lambda_.3} parent=50 // loop_exit
                  _
              $region51: #{_lambda_.3} parent=35 // pred_fallthru
                _
              // Predicated region
              $region59: #{_lambda_.3} parent=35 // pred_check
                _
              $region60: #{_lambda_.3} parent=35 // pred_check_branch
                %173 = sbr.rel target = $region62
              $region61: #{_lambda_.3} parent=35 // pred_region
                _
              $region62: #{_lambda_.3} parent=35 // pred_fallthru
                _
            $region36: #{_lambda_.3} parent=31 // pred_fallthru
              _
            // Predicated region
            $region37: #{_lambda_.3} parent=31 // pred_check
              _
            $region38: #{_lambda_.3} parent=31 // pred_check_branch
              %143 = sbr.rel target = $region40
            $region39: #{_lambda_.3} parent=31 // pred_region
              %s145 = ssub.s32 256, 1
              loop: start=0, step=1, limit=1
              $region41: #{_lambda_.3} parent=39 // loop_pre_header
                _
              $region42: #{_lambda_.3} parent=39 // loop_header
                %s147 = sphi 0, %s151
                %p148 = scmp.ge.s32.totalorder %s147, 1
                %s152 = sphi %s137, %s137
                %s153 = sphi %s134, %s134
              $region43: #{_lambda_.3} parent=39 // loop_header_branch
                %150 = sbr.rel (%p148) target = $region47
              $region44: #{_lambda_.3} parent=39 // loop_body
                %v154 = vld [vmem:[%s152] sm:%s145]
                %155 = vst [vmem:[%s153] sm:%s145] %v154
                %v156 = vld [vmem:[%s152 + $0x10] sm:%s145]
                %157 = vst [vmem:[%s153 + $0x8] sm:%s145] %v156
              $region45: #{_lambda_.3} parent=39 // loop_footer
                %s151 = sadd.s32 1, %s147
              $region46: #{_lambda_.3} parent=39 // loop_footer_branch
                %146 = sbr.rel target = $region42
              $region47: #{_lambda_.3} parent=39 // loop_exit
                _
            $region40: #{_lambda_.3} parent=31 // pred_fallthru
              _
          $region32: #{_lambda_.3} parent=27 // pred_fallthru
            _
          %174 = vnop
        $region28: #{_lambda_.3} parent=23 // pred_fallthru
          _
      $region24: #{_lambda_.3} parent=5 // pred_fallthru
        _
      %p175 = scmp.le.s32.totalorder 1, %s9
      %p176 = scmp.lt.s32.totalorder %s9, 3
      %p177 = pnand %p175, %p176
      %p178 = pneg %p177
      // Predicated region
      $region63: #{_lambda_.3} parent=5 // pred_check
        _
      $region64: #{_lambda_.3} parent=5 // pred_check_branch
        %180 = sbr.rel (%p177) target = $region66
      $region65: #{_lambda_.3} parent=5 // pred_region
        %s181 = ssub.s32 %s9, 1
        %s182 = sand.u32 %s64, 1
        %s183 = sand.u32 %s64, 1
        %s184 = smul.addr %s183, 16
        %s185 = scalar_lea.vmem [#allocation2], %s184
        // Predicated region
        $region67: #{_lambda_.3} parent=65 // pred_check
          %p186 = pneg %p77
        $region68: #{_lambda_.3} parent=65 // pred_check_branch
          %188 = sbr.rel (%p186) target = $region70
        $region69: #{_lambda_.3} parent=65 // pred_region
          _
        $region70: #{_lambda_.3} parent=65 // pred_fallthru
          _
        %p189 = pneg %p30
        %p190 = pneg %p27
        %p191 = pneg %p51
        %p192 = pneg %p48
        %s193 = sand.u32 %s64, 1
        %s194 = sand.u32 %s64, 1
        %s195 = smul.addr %s194, 16
        %s196 = scalar_lea.vmem [#allocation2], %s195
        %p197 = pneg %p77
        %p198 = pneg %p74
        %p199 = pneg %p103
        %p200 = pneg %p100
        %s201 = smul.u32 2, %s14
        %p202 = scmp.lt.s32.totalorder %s201, 3
        %s203 = scalar_select %p202, %s201, 3
        %s204 = smul.addr %s203, 4
        %s205 = scalar_lea.vmem %s3, %s204
        %s206 = smul.u32 2, %s14
        %s207 = smul.u32 2, %s14
        %p208 = scmp.lt.s32.totalorder %s207, 3
        %s209 = scalar_select %p208, %s207, 3
        %s210 = smul.addr %s209, 4
        %s211 = scalar_lea.vmem %s3, %s210
        %s212 = smul.u32 2, %s14
        %v214 = vld [vmem:[%s0] sm:$0xf]
        %v215 = vld [vmem:[%s185] sm:$0xff]
        %v216 = vld [vmem:[%s185 + $0x8] sm:$0xff]
        %v217 = vld [vmem:[%s1] sm:$0xff]
        %219 = vset.pattern.permute.xlu0 0
        %220 = vperm.xlu0 %219, %v217
        %v221 = vpop.permute.xlu0 %220
        %v225 = vunpack.c.l.b16 %v215
        %v226 = vunpack.c.h.b16 %v215
        %v227 = vunpack.c.l.b16 %v216
        %v228 = vunpack.c.h.b16 %v216
        %v229 = vpack.c.b16 %v227, %v225
        %v230 = vpack.c.b16 %v228, %v226
        %vm233 = vcmask 130048
        %v235 = vsel %vm233, %v214, 0
        %237 = vmatprep.subr.bf16.mxu0 0
        %238 = vmatpush1.bf16.msra.mxu0 0
        %239 = vmatprep.subr.bf16.mxu0 0
        %240 = vmatpush1.bf16.msra.mxu0 0
        %241 = vmatprep.subr.bf16.mxu0 0
        %242 = vmatpush1.bf16.msra.mxu0 0
        %243 = vmatprep.subr.bf16.mxu0 0
        %244 = vmatpush1.bf16.msra.mxu0 0
        %245 = vmatprep.subr.bf16.mxu0 0
        %246 = vmatpush1.bf16.msra.mxu0 0
        %247 = vmatprep.subr.bf16.mxu0 0
        %248 = vmatpush1.bf16.msra.mxu0 0
        %249 = vmatprep.subr.bf16.mxu0 0
        %250 = vmatpush1.bf16.msra.mxu0 0
        %251 = vmatprep.subr.bf16.mxu0 %v230
        %252 = vmatpush1.bf16.msra.mxu0 %v229
        %253 = vmatprep.subr.bf16.mxu0 0
        %254 = vmatpush2.bf16.msra.mxu0 0
        %255 = vmatprep.subr.bf16.mxu0 0
        %256 = vmatpush2.bf16.msra.mxu0 0
        %257 = vmatprep.subr.bf16.mxu0 0
        %258 = vmatpush2.bf16.msra.mxu0 0
        %259 = vmatprep.subr.bf16.mxu0 0
        %260 = vmatpush2.bf16.msra.mxu0 0
        %261 = vmatprep.subr.bf16.mxu0 0
        %262 = vmatpush2.bf16.msra.mxu0 0
        %263 = vmatprep.subr.bf16.mxu0 0
        %264 = vmatpush2.bf16.msra.mxu0 0
        %265 = vmatprep.subr.bf16.mxu0 0
        %266 = vmatpush2.bf16.msra.mxu0 0
        %267 = vmatprep.subr.bf16.mxu0 0
        %268 = vmatpush2.bf16.msra.mxu0 0
        %269 = vmatprep.mubr.bf16.mxu0 0
        %270 = vmatmul.mubr.bf16.gmra.mxu0 %v235
        %v271 = vpop.f32.mrf.mxu0
        %v272 = vadd.f32 %v221, %v271
        %v273 = vpop.f32.mrf.mxu0
        %v274 = vadd.f32 %v221, %v273
        %v275 = vpop.f32.mrf.mxu0
        %v276 = vpop.f32.mrf.mxu0
        %277 = vdwg.mxu0
        %vm278 = vcmp.ge.f32.partialorder %v272, 0.0
        %vm279 = vcmp.ge.f32.partialorder %v274, 0.0
        %v280 = vmul.f32 %v272, 0.01
        %v281 = vmul.f32 %v274, 0.01
        %v282 = vsel %vm278, %v272, %v280
        %v283 = vsel %vm279, %v274, %v281
        %v284 = vpack.c.bf16 %v282, %v282
        %v285 = vpack.c.bf16 %v283, %v283
        %v288 = vunpack.c.l.b16 %v284
        %v289 = vunpack.c.l.b16 %v285
        %v290 = vpack.c.b16 %v289, %v288
        %292 = vst [vmem:[%s211] sm:$0xff] %v290
        %s293 = smul.u32 2, %s14
        %p294 = scmp.lt.s32.totalorder %s293, 3
        %s295 = scalar_select %p294, %s293, 3
        %s296 = smul.addr %s295, 4
        %s297 = scalar_lea.vmem %s3, %s296
        // Predicated region
        $region71: #{_lambda_.3} parent=65 // pred_check
          %p298 = pneg %p100
        $region72: #{_lambda_.3} parent=65 // pred_check_branch
          %300 = sbr.rel (%p298) target = $region74
        $region73: #{_lambda_.3} parent=65 // pred_region
          %s301 = smul.u32 2, %s14
        $region74: #{_lambda_.3} parent=65 // pred_fallthru
          _
      $region66: #{_lambda_.3} parent=5 // pred_fallthru
        _
      %p302 = scmp.le.s32.totalorder 2, %s9
      // Predicated region
      $region75: #{_lambda_.3} parent=5 // pred_check
        %p303 = pneg %p302
      $region76: #{_lambda_.3} parent=5 // pred_check_branch
        %305 = sbr.rel (%p303) target = $region78
      $region77: #{_lambda_.3} parent=5 // pred_region
        %s306 = ssub.s32 %s9, 2
        // Predicated region
        $region79: #{_lambda_.3} parent=77 // pred_check
          %p307 = pneg %p106
        $region80: #{_lambda_.3} parent=77 // pred_check_branch
          %309 = sbr.rel (%p307) target = $region82
        $region81: #{_lambda_.3} parent=77 // pred_region
          %s310 = smul.u32 2, %s15
          %p311 = scmp.lt.s32.totalorder %s310, 3
          %s312 = scalar_select %p311, %s310, 3
          %s313 = smul.addr %s312, 4
          %s314 = scalar_lea.vmem %s3, %s313
        $region82: #{_lambda_.3} parent=77 // pred_fallthru
          _
      $region78: #{_lambda_.3} parent=5 // pred_fallthru
        _
    $region6: #{_lambda_.3} parent=1 // loop_footer
      %s13 = sadd.s32 1, %s9
    $region7: #{_lambda_.3} parent=1 // loop_footer_branch
      %8 = sbr.rel target = $region3
    $region8: #{_lambda_.3} parent=1 // loop_exit
      _

// kernel: _lambda_.4
$region0: #{_lambda_.4}
  #allocation0 [shape = 'u32[]', space=smem, size = 0x4, offset = 0x4, fixed_abs, tag = 'smem constant byte address 0x4 - core index']
  #allocation1 [shape = 'u32[144,128]{1,0:T(1,128)}', space=vmem, size = 0x12000, scoped, tag = 'internal scratch']
  %s0 = inlined_call_operand.vmem [shape: bf16[16,72], index: 0, kind: input, shape index: {}]
  %s1 = inlined_call_operand.vmem [shape: f32[16,1], index: 1, kind: input, shape index: {}]
  %s2 = inlined_call_operand.vmem [shape: bf16[72,512], index: 2, kind: input, shape index: {}]
  %s3 = inlined_call_operand.vmem [shape: bf16[16,512], index: 3, kind: output, shape index: {}]
  %s4 = sld [smem:[#allocation0]]
  $region117: #{_lambda_.4} parent=0
    _
  %s6 = ssub.s32 1, %s4
  %s7 = scalar_select 0, %s6, %s4
  $region1: #{_lambda_.4} parent=0
    #allocation2 [shape = 'u8[73728]{0}', space=vmem, size = 0x12000, scoped, tag = 'input window, operand 2']
    #allocation3 [shape = 'u8[16384]{0}', space=vmem, size = 0x4000, scoped, tag = 'output window, operand 0']
    loop: start=0, step=1, limit=4
    $region2: #{_lambda_.4} parent=1 // loop_pre_header
      _
    $region3: #{_lambda_.4} parent=1 // loop_header
      %s9 = sphi 0, %s13
      %p10 = scmp.ge.s32.totalorder %s9, 4
      %s17 = sphi 0, %s17
      %s19 = sphi 0, %s17
      %s20 = sphi 0, %s19
      %s34 = sphi 0, %s20
      %s38 = sphi 0, %s38
      %s40 = sphi 0, %s38
      %s41 = sphi 0, %s40
      %s55 = sphi 0, %s41
      %s61 = sphi 0, %s63
      %s64 = sphi 0, %s61
      %s65 = sphi 0, %s64
      %s81 = sphi 0, %s65
      %s87 = sphi 0, %s89
      %s90 = sphi 0, %s87
      %s91 = sphi 0, %s90
      %s107 = sphi 0, %s91
    $region4: #{_lambda_.4} parent=1 // loop_header_branch
      %12 = sbr.rel (%p10) target = $region8
    $region5: #{_lambda_.4} parent=1 // loop_body
      %s14 = ssub.s32 %s9, 1
      %s15 = ssub.s32 %s9, 2
      %s16 = sadd.s32 %s9, 1
      %s18 = sadd.s32 %s17, 1
      %p21 = scmp.eq.s32.totalorder %s9, 1
      %p22 = scmp.ne.s32.totalorder %s17, %s19
      %p23 = scmp.eq.s32.totalorder %s9, 0
      %p24 = por %p22, %p23
      %p25 = scmp.ne.s32.totalorder %s17, %s19
      %p26 = scmp.eq.s32.totalorder %s14, 1
      %p27 = por %p25, %p26
      %p28 = scmp.ne.s32.totalorder %s19, %s20
      %p29 = scmp.eq.s32.totalorder %s14, 0
      %p30 = por %p28, %p29
      %p31 = scmp.ne.s32.totalorder %s19, %s20
      %p32 = scmp.eq.s32.totalorder %s15, 1
      %p33 = por %p31, %p32
      %p35 = scmp.ne.s32.totalorder %s20, %s34
      %p36 = scmp.eq.s32.totalorder %s15, 0
      %p37 = por %p35, %p36
      %s39 = sadd.s32 %s38, 1
      %p42 = scmp.eq.s32.totalorder %s9, 1
      %p43 = scmp.ne.s32.totalorder %s38, %s40
      %p44 = scmp.eq.s32.totalorder %s9, 0
      %p45 = por %p43, %p44
      %p46 = scmp.ne.s32.totalorder %s38, %s40
      %p47 = scmp.eq.s32.totalorder %s14, 1
      %p48 = por %p46, %p47
      %p49 = scmp.ne.s32.totalorder %s40, %s41
      %p50 = scmp.eq.s32.totalorder %s14, 0
      %p51 = por %p49, %p50
      %p52 = scmp.ne.s32.totalorder %s40, %s41
      %p53 = scmp.eq.s32.totalorder %s15, 1
      %p54 = por %p52, %p53
      %p56 = scmp.ne.s32.totalorder %s41, %s55
      %p57 = scmp.eq.s32.totalorder %s15, 0
      %p58 = por %p56, %p57
      %s59 = ssub.s32 %s9, %s16
      %p60 = scmp.eq.s32.totalorder %s59, 0
      %s62 = sadd.s32 %s61, 1
      %s63 = scalar_select %p60, %s61, %s62
      %p66 = pneg %p60
      %p67 = scmp.eq.s32.totalorder %s9, 1
      %p68 = por %p66, %p67
      %p69 = scmp.ne.s32.totalorder %s61, %s64
      %p70 = scmp.eq.s32.totalorder %s9, 0
      %p71 = por %p69, %p70
      %p72 = scmp.ne.s32.totalorder %s61, %s64
      %p73 = scmp.eq.s32.totalorder %s14, 1
      %p74 = por %p72, %p73
      %p75 = scmp.ne.s32.totalorder %s64, %s65
      %p76 = scmp.eq.s32.totalorder %s14, 0
      %p77 = por %p75, %p76
      %p78 = scmp.ne.s32.totalorder %s64, %s65
      %p79 = scmp.eq.s32.totalorder %s15, 1
      %p80 = por %p78, %p79
      %p82 = scmp.ne.s32.totalorder %s65, %s81
      %p83 = scmp.eq.s32.totalorder %s15, 0
      %p84 = por %p82, %p83
      %s85 = ssub.s32 %s9, %s16
      %p86 = scmp.eq.s32.totalorder %s85, 0
      %s88 = sadd.s32 %s87, 1
      %s89 = scalar_select %p86, %s87, %s88
      %p92 = pneg %p86
      %p93 = scmp.eq.s32.totalorder %s9, 1
      %p94 = por %p92, %p93
      %p95 = scmp.ne.s32.totalorder %s87, %s90
      %p96 = scmp.eq.s32.totalorder %s9, 0
      %p97 = por %p95, %p96
      %p98 = scmp.ne.s32.totalorder %s87, %s90
      %p99 = scmp.eq.s32.totalorder %s14, 1
      %p100 = por %p98, %p99
      %p101 = scmp.ne.s32.totalorder %s90, %s91
      %p102 = scmp.eq.s32.totalorder %s14, 0
      %p103 = por %p101, %p102
      %p104 = scmp.ne.s32.totalorder %s90, %s91
      %p105 = scmp.eq.s32.totalorder %s15, 1
      %p106 = por %p104, %p105
      %p108 = scmp.ne.s32.totalorder %s91, %s107
      %p109 = scmp.eq.s32.totalorder %s15, 0
      %p110 = por %p108, %p109
      %p111 = scmp.le.s32.totalorder 1, %s9
      %p112 = scmp.lt.s32.totalorder %s9, 3
      %p113 = pnand %p111, %p112
      %p114 = pneg %p113
      // Predicated region
      $region9: #{_lambda_.4} parent=5 // pred_check
        _
      $region10: #{_lambda_.4} parent=5 // pred_check_branch
        %116 = sbr.rel (%p113) target = $region12
      $region11: #{_lambda_.4} parent=5 // pred_region
        %s117 = ssub.s32 %s9, 1
        // Predicated region
        $region13: #{_lambda_.4} parent=11 // pred_check
          %p118 = pneg %p30
        $region14: #{_lambda_.4} parent=11 // pred_check_branch
          %120 = sbr.rel (%p118) target = $region16
        $region15: #{_lambda_.4} parent=11 // pred_region
          _
        $region16: #{_lambda_.4} parent=11 // pred_fallthru
          _
        // Predicated region
        $region17: #{_lambda_.4} parent=11 // pred_check
          %p121 = pneg %p51
        $region18: #{_lambda_.4} parent=11 // pred_check_branch
          %123 = sbr.rel (%p121) target = $region20
        $region19: #{_lambda_.4} parent=11 // pred_region
          _
        $region20: #{_lambda_.4} parent=11 // pred_fallthru
          _
      $region12: #{_lambda_.4} parent=5 // pred_fallthru
        _
      %p124 = scmp.lt.s32.totalorder %s9, 2
      // Predicated region
      $region21: #{_lambda_.4} parent=5 // pred_check
        %p125 = pneg %p124
      $region22: #{_lambda_.4} parent=5 // pred_check_branch
        %127 = sbr.rel (%p125) target = $region24
      $region23: #{_lambda_.4} parent=5 // pred_region
        // Predicated region
        $region25: #{_lambda_.4} parent=23 // pred_check
          %p128 = pneg %p71
        $region26: #{_lambda_.4} parent=23 // pred_check_branch
          %130 = sbr.rel (%p128) target = $region28
        $region27: #{_lambda_.4} parent=23 // pred_region
          %s131 = sand.u32 %s61, 1
          %s132 = sand.u32 %s61, 1
          %s133 = smul.addr %s132, 72
          %s134 = scalar_lea.vmem [#allocation2], %s133
          %s135 = smul.u32 2, %s9
          %s136 = smul.addr %s135, 4
          %s137 = scalar_lea.vmem %s2, %s136
          // Predicated region
          $region29: #{_lambda_.4} parent=27 // pred_check
            _
          $region30: #{_lambda_.4} parent=27 // pred_check_branch
            %139 = sbr.rel (0) target = $region32
          $region31: #{_lambda_.4} parent=27 // pred_region
            // Predicated region
            $region33: #{_lambda_.4} parent=31 // pred_check
              _
            $region34: #{_lambda_.4} parent=31 // pred_check_branch
              %141 = sbr.rel (0) target = $region36
            $region35: #{_lambda_.4} parent=31 // pred_region
              // Predicated region
              $region48: #{_lambda_.4} parent=35 // pred_check
                _
              $region49: #{_lambda_.4} parent=35 // pred_check_branch
                %173 = sbr.rel (0) target = $region51
              $region50: #{_lambda_.4} parent=35 // pred_region
                loop: start=0, step=1, limit=1
                $region52: #{_lambda_.4} parent=50 // loop_pre_header
                  _
                $region53: #{_lambda_.4} parent=50 // loop_header
                  %s175 = sphi 0, %s179
                  %p176 = scmp.ge.s32.totalorder %s175, 1
                  %s180 = sphi %s137, %s137
                  %s181 = sphi %s134, %s134
                $region54: #{_lambda_.4} parent=50 // loop_header_branch
                  %178 = sbr.rel (%p176) target = $region58
                $region55: #{_lambda_.4} parent=50 // loop_body
                  %v182 = vld [vmem:[%s180] sm:$0xff]
                  %183 = vst [vmem:[%s181] sm:$0xff] %v182
                  %v184 = vld [vmem:[%s180 + $0x10] sm:$0xff]
                  %185 = vst [vmem:[%s181 + $0x8] sm:$0xff] %v184
                  %v186 = vld [vmem:[%s180 + $0x20] sm:$0xff]
                  %187 = vst [vmem:[%s181 + $0x10] sm:$0xff] %v186
                  %v188 = vld [vmem:[%s180 + $0x30] sm:$0xff]
                  %189 = vst [vmem:[%s181 + $0x18] sm:$0xff] %v188
                  %v190 = vld [vmem:[%s180 + $0x40] sm:$0xff]
                  %191 = vst [vmem:[%s181 + $0x20] sm:$0xff] %v190
                  %v192 = vld [vmem:[%s180 + $0x50] sm:$0xff]
                  %193 = vst [vmem:[%s181 + $0x28] sm:$0xff] %v192
                  %v194 = vld [vmem:[%s180 + $0x60] sm:$0xff]
                  %195 = vst [vmem:[%s181 + $0x30] sm:$0xff] %v194
                  %v196 = vld [vmem:[%s180 + $0x70] sm:$0xff]
                  %197 = vst [vmem:[%s181 + $0x38] sm:$0xff] %v196
                  %v198 = vld [vmem:[%s180 + $0x80] sm:$0xff]
                  %199 = vst [vmem:[%s181 + $0x40] sm:$0xff] %v198
                $region56: #{_lambda_.4} parent=50 // loop_footer
                  %s179 = sadd.s32 1, %s175
                $region57: #{_lambda_.4} parent=50 // loop_footer_branch
                  %174 = sbr.rel target = $region53
                $region58: #{_lambda_.4} parent=50 // loop_exit
                  _
              $region51: #{_lambda_.4} parent=35 // pred_fallthru
                _
              // Predicated region
              $region59: #{_lambda_.4} parent=35 // pred_check
                _
              $region60: #{_lambda_.4} parent=35 // pred_check_branch
                %201 = sbr.rel target = $region62
              $region61: #{_lambda_.4} parent=35 // pred_region
                _
              $region62: #{_lambda_.4} parent=35 // pred_fallthru
                _
            $region36: #{_lambda_.4} parent=31 // pred_fallthru
              _
            // Predicated region
            $region37: #{_lambda_.4} parent=31 // pred_check
              _
            $region38: #{_lambda_.4} parent=31 // pred_check_branch
              %143 = sbr.rel target = $region40
            $region39: #{_lambda_.4} parent=31 // pred_region
              %s145 = ssub.s32 256, 1
              loop: start=0, step=1, limit=1
              $region41: #{_lambda_.4} parent=39 // loop_pre_header
                _
              $region42: #{_lambda_.4} parent=39 // loop_header
                %s147 = sphi 0, %s151
                %p148 = scmp.ge.s32.totalorder %s147, 1
                %s152 = sphi %s137, %s137
                %s153 = sphi %s134, %s134
              $region43: #{_lambda_.4} parent=39 // loop_header_branch
                %150 = sbr.rel (%p148) target = $region47
              $region44: #{_lambda_.4} parent=39 // loop_body
                %v154 = vld [vmem:[%s152] sm:%s145]
                %155 = vst [vmem:[%s153] sm:%s145] %v154
                %v156 = vld [vmem:[%s152 + $0x10] sm:%s145]
                %157 = vst [vmem:[%s153 + $0x8] sm:%s145] %v156
                %v158 = vld [vmem:[%s152 + $0x20] sm:%s145]
                %159 = vst [vmem:[%s153 + $0x10] sm:%s145] %v158
                %v160 = vld [vmem:[%s152 + $0x30] sm:%s145]
                %161 = vst [vmem:[%s153 + $0x18] sm:%s145] %v160
                %v162 = vld [vmem:[%s152 + $0x40] sm:%s145]
                %163 = vst [vmem:[%s153 + $0x20] sm:%s145] %v162
                %v164 = vld [vmem:[%s152 + $0x50] sm:%s145]
                %165 = vst [vmem:[%s153 + $0x28] sm:%s145] %v164
                %v166 = vld [vmem:[%s152 + $0x60] sm:%s145]
                %167 = vst [vmem:[%s153 + $0x30] sm:%s145] %v166
                %v168 = vld [vmem:[%s152 + $0x70] sm:%s145]
                %169 = vst [vmem:[%s153 + $0x38] sm:%s145] %v168
                %v170 = vld [vmem:[%s152 + $0x80] sm:%s145]
                %171 = vst [vmem:[%s153 + $0x40] sm:%s145] %v170
              $region45: #{_lambda_.4} parent=39 // loop_footer
                %s151 = sadd.s32 1, %s147
              $region46: #{_lambda_.4} parent=39 // loop_footer_branch
                %146 = sbr.rel target = $region42
              $region47: #{_lambda_.4} parent=39 // loop_exit
                _
            $region40: #{_lambda_.4} parent=31 // pred_fallthru
              _
          $region32: #{_lambda_.4} parent=27 // pred_fallthru
            _
          %202 = vnop
        $region28: #{_lambda_.4} parent=23 // pred_fallthru
          _
      $region24: #{_lambda_.4} parent=5 // pred_fallthru
        _
      %p203 = scmp.le.s32.totalorder 1, %s9
      %p204 = scmp.lt.s32.totalorder %s9, 3
      %p205 = pnand %p203, %p204
      %p206 = pneg %p205
      // Predicated region
      $region63: #{_lambda_.4} parent=5 // pred_check
        _
      $region64: #{_lambda_.4} parent=5 // pred_check_branch
        %208 = sbr.rel (%p205) target = $region66
      $region65: #{_lambda_.4} parent=5 // pred_region
        %s209 = ssub.s32 %s9, 1
        %s210 = sand.u32 %s64, 1
        %s211 = sand.u32 %s64, 1
        %s212 = smul.addr %s211, 72
        %s213 = scalar_lea.vmem [#allocation2], %s212
        // Predicated region
        $region67: #{_lambda_.4} parent=65 // pred_check
          %p214 = pneg %p77
        $region68: #{_lambda_.4} parent=65 // pred_check_branch
          %216 = sbr.rel (%p214) target = $region70
        $region69: #{_lambda_.4} parent=65 // pred_region
          _
        $region70: #{_lambda_.4} parent=65 // pred_fallthru
          _
        %p217 = pneg %p30
        %p218 = pneg %p27
        %p219 = pneg %p51
        %p220 = pneg %p48
        %s221 = sand.u32 %s64, 1
        %s222 = sand.u32 %s64, 1
        %s223 = smul.addr %s222, 72
        %s224 = scalar_lea.vmem [#allocation2], %s223
        %p225 = pneg %p77
        %p226 = pneg %p74
        %p227 = pneg %p103
        %p228 = pneg %p100
        %s229 = sand.u32 %s90, 1
        %s230 = sand.u32 %s90, 1
        %s231 = smul.addr %s230, 16
        %s232 = scalar_lea.vmem [#allocation3], %s231
        %s233 = smul.u32 2, %s14
        %s234 = smul.u32 2, %s14
        %v236 = vld [vmem:[%s0] sm:$0xf]
        %v237 = vld [vmem:[%s0 + $0x4] sm:$0xf]
        %v238 = vld [vmem:[%s213] sm:$0xff]
        %v239 = vld [vmem:[%s213 + $0x8] sm:$0xff]
        %v240 = vld [vmem:[%s213 + $0x10] sm:$0xff]
        %v241 = vld [vmem:[%s213 + $0x18] sm:$0xff]
        %v242 = vld [vmem:[%s213 + $0x20] sm:$0xff]
        %v243 = vld [vmem:[%s213 + $0x28] sm:$0xff]
        %v244 = vld [vmem:[%s213 + $0x30] sm:$0xff]
        %v245 = vld [vmem:[%s213 + $0x38] sm:$0xff]
        %v246 = vld [vmem:[%s213 + $0x40] sm:$0xff]
        %v247 = vld [vmem:[%s1] sm:$0xff]
        %v248 = vld [vmem:[%s1 + $0x8] sm:$0xff]
        %250 = vset.pattern.permute.xlu0 0
        %251 = vperm.xlu0 %250, %v247
        %v252 = vpop.permute.xlu0 %251
        %255 = vset.pattern.permute.xlu0 0
        %256 = vperm.xlu0 %255, %v248
        %v257 = vpop.permute.xlu0 %256
        %v261 = vunpack.c.l.b16 %v236
        %v262 = vunpack.c.l.b16 %v237
        %v263 = vpack.c.b16 %v262, %v261
        %v273 = vunpack.c.l.b16 %v238
        %v274 = vunpack.c.h.b16 %v238
        %v275 = vunpack.c.l.b16 %v239
        %v276 = vunpack.c.h.b16 %v239
        %v277 = vunpack.c.l.b16 %v240
        %v278 = vunpack.c.h.b16 %v240
        %v279 = vunpack.c.l.b16 %v241
        %v280 = vunpack.c.h.b16 %v241
        %v281 = vunpack.c.l.b16 %v242
        %v282 = vunpack.c.h.b16 %v242
        %v283 = vunpack.c.l.b16 %v243
        %v284 = vunpack.c.h.b16 %v243
        %v285 = vunpack.c.l.b16 %v244
        %v286 = vunpack.c.h.b16 %v244
        %v287 = vunpack.c.l.b16 %v245
        %v288 = vunpack.c.h.b16 %v245
        %v289 = vunpack.c.l.b16 %v246
        %v290 = vunpack.c.h.b16 %v246
        %v291 = vpack.c.b16 %v275, %v273
        %v292 = vpack.c.b16 %v276, %v274
        %v293 = vpack.c.b16 %v279, %v277
        %v294 = vpack.c.b16 %v280, %v278
        %v295 = vpack.c.b16 %v283, %v281
        %v296 = vpack.c.b16 %v284, %v282
        %v297 = vpack.c.b16 %v287, %v285
        %v298 = vpack.c.b16 %v288, %v286
        %v299 = vpack.c.b16 %v289, %v289
        %v300 = vpack.c.b16 %v290, %v290
        %vm309 = vcmask 588800
        %v311 = vsel %vm309, %v263, 0
        %vm313 = vcmask 1043456
        %v315 = vsel %vm313, %v299, 0
        %v318 = vsel %vm313, %v300, 0
        %320 = vmatprep.subr.bf16.mxu0 0
        %321 = vmatpush1.bf16.msra.mxu0 0
        %322 = vmatprep.subr.bf16.mxu0 0
        %323 = vmatpush1.bf16.msra.mxu0 0
        %324 = vmatprep.subr.bf16.mxu0 0
        %325 = vmatpush1.bf16.msra.mxu0 0
        %326 = vmatprep.subr.bf16.mxu0 %v318
        %327 = vmatpush1.bf16.msra.mxu0 %v315
        %328 = vmatprep.subr.bf16.mxu0 %v298
        %329 = vmatpush1.bf16.msra.mxu0 %v297
        %330 = vmatprep.subr.bf16.mxu0 %v296
        %331 = vmatpush1.bf16.msra.mxu0 %v295
        %332 = vmatprep.subr.bf16.mxu0 %v294
        %333 = vmatpush1.bf16.msra.mxu0 %v293
        %334 = vmatprep.subr.bf16.mxu0 %v292
        %335 = vmatpush1.bf16.msra.mxu0 %v291
        %336 = vmatprep.subr.bf16.mxu0 0
        %337 = vmatpush2.bf16.msra.mxu0 0
        %338 = vmatprep.subr.bf16.mxu0 0
        %339 = vmatpush2.bf16.msra.mxu0 0
        %340 = vmatprep.subr.bf16.mxu0 0
        %341 = vmatpush2.bf16.msra.mxu0 0
        %342 = vmatprep.subr.bf16.mxu0 0
        %343 = vmatpush2.bf16.msra.mxu0 0
        %344 = vmatprep.subr.bf16.mxu0 0
        %345 = vmatpush2.bf16.msra.mxu0 0
        %346 = vmatprep.subr.bf16.mxu0 0
        %347 = vmatpush2.bf16.msra.mxu0 0
        %348 = vmatprep.subr.bf16.mxu0 0
        %349 = vmatpush2.bf16.msra.mxu0 0
        %350 = vmatprep.subr.bf16.mxu0 0
        %351 = vmatpush2.bf16.msra.mxu0 0
        %352 = vmatprep.mubr.bf16.mxu0 0
        %353 = vmatmul.mubr.bf16.gmra.mxu0 %v311
        %v354 = vpop.f32.mrf.mxu0
        %v355 = vadd.f32 %v252, %v354
        %v356 = vpop.f32.mrf.mxu0
        %v357 = vadd.f32 %v252, %v356
        %v358 = vpop.f32.mrf.mxu0
        %v359 = vadd.f32 %v257, %v358
        %v360 = vpop.f32.mrf.mxu0
        %v361 = vadd.f32 %v257, %v360
        %362 = vdwg.mxu0
        %vm363 = vcmp.ge.f32.partialorder %v355, 0.0
        %vm364 = vcmp.ge.f32.partialorder %v357, 0.0
        %vm365 = vcmp.ge.f32.partialorder %v359, 0.0
        %vm366 = vcmp.ge.f32.partialorder %v361, 0.0
        %v367 = vmul.f32 %v355, 0.01
        %v368 = vmul.f32 %v357, 0.01
        %v369 = vmul.f32 %v359, 0.01
        %v370 = vmul.f32 %v361, 0.01
        %v371 = vsel %vm363, %v355, %v367
        %v372 = vsel %vm364, %v357, %v368
        %v373 = vsel %vm365, %v359, %v369
        %v374 = vsel %vm366, %v361, %v370
        %v375 = vpack.c.bf16 %v373, %v371
        %v376 = vpack.c.bf16 %v374, %v372
        %v379 = vunpack.c.l.b16 %v375
        %v380 = vunpack.c.l.b16 %v376
        %v381 = vunpack.c.h.b16 %v375
        %v382 = vunpack.c.h.b16 %v376
        %v383 = vpack.c.b16 %v380, %v379
        %v384 = vpack.c.b16 %v382, %v381
        %387 = vst [vmem:[%s232] sm:$0xff] %v383
        %388 = vst [vmem:[%s232 + $0x8] sm:$0xff] %v384
        %s389 = sand.u32 %s90, 1
        %s390 = sand.u32 %s90, 1
        %s391 = smul.addr %s390, 16
        %s392 = scalar_lea.vmem [#allocation3], %s391
        // Predicated region
        $region71: #{_lambda_.4} parent=65 // pred_check
          %p393 = pneg %p100
        $region72: #{_lambda_.4} parent=65 // pred_check_branch
          %395 = sbr.rel (%p393) target = $region74
        $region73: #{_lambda_.4} parent=65 // pred_region
          %s396 = smul.u32 2, %s14
          %s397 = smul.addr %s396, 4
          %s398 = scalar_lea.vmem %s3, %s397
          // Predicated region
          $region75: #{_lambda_.4} parent=73 // pred_check
            _
          $region76: #{_lambda_.4} parent=73 // pred_check_branch
            %400 = sbr.rel (0) target = $region78
          $region77: #{_lambda_.4} parent=73 // pred_region
            // Predicated region
            $region79: #{_lambda_.4} parent=77 // pred_check
              _
            $region80: #{_lambda_.4} parent=77 // pred_check_branch
              %402 = sbr.rel (0) target = $region82
            $region81: #{_lambda_.4} parent=77 // pred_region
              // Predicated region
              $region94: #{_lambda_.4} parent=81 // pred_check
                _
              $region95: #{_lambda_.4} parent=81 // pred_check_branch
                %420 = sbr.rel (0) target = $region97
              $region96: #{_lambda_.4} parent=81 // pred_region
                loop: start=0, step=1, limit=1
                $region98: #{_lambda_.4} parent=96 // loop_pre_header
                  _
                $region99: #{_lambda_.4} parent=96 // loop_header
                  %s422 = sphi 0, %s426
                  %p423 = scmp.ge.s32.totalorder %s422, 1
                  %s427 = sphi %s392, %s392
                  %s428 = sphi %s398, %s398
                $region100: #{_lambda_.4} parent=96 // loop_header_branch
                  %425 = sbr.rel (%p423) target = $region104
                $region101: #{_lambda_.4} parent=96 // loop_body
                  %v429 = vld [vmem:[%s427] sm:$0xff]
                  %430 = vst [vmem:[%s428] sm:$0xff] %v429
                  %v431 = vld [vmem:[%s427 + $0x8] sm:$0xff]
                  %432 = vst [vmem:[%s428 + $0x10] sm:$0xff] %v431
                $region102: #{_lambda_.4} parent=96 // loop_footer
                  %s426 = sadd.s32 1, %s422
                $region103: #{_lambda_.4} parent=96 // loop_footer_branch
                  %421 = sbr.rel target = $region99
                $region104: #{_lambda_.4} parent=96 // loop_exit
                  _
              $region97: #{_lambda_.4} parent=81 // pred_fallthru
                _
              // Predicated region
              $region105: #{_lambda_.4} parent=81 // pred_check
                _
              $region106: #{_lambda_.4} parent=81 // pred_check_branch
                %434 = sbr.rel target = $region108
              $region107: #{_lambda_.4} parent=81 // pred_region
                _
              $region108: #{_lambda_.4} parent=81 // pred_fallthru
                _
            $region82: #{_lambda_.4} parent=77 // pred_fallthru
              _
            // Predicated region
            $region83: #{_lambda_.4} parent=77 // pred_check
              _
            $region84: #{_lambda_.4} parent=77 // pred_check_branch
              %404 = sbr.rel target = $region86
            $region85: #{_lambda_.4} parent=77 // pred_region
              %s406 = ssub.s32 256, 1
              loop: start=0, step=1, limit=1
              $region87: #{_lambda_.4} parent=85 // loop_pre_header
                _
              $region88: #{_lambda_.4} parent=85 // loop_header
                %s408 = sphi 0, %s412
                %p409 = scmp.ge.s32.totalorder %s408, 1
                %s413 = sphi %s392, %s392
                %s414 = sphi %s398, %s398
              $region89: #{_lambda_.4} parent=85 // loop_header_branch
                %411 = sbr.rel (%p409) target = $region93
              $region90: #{_lambda_.4} parent=85 // loop_body
                %v415 = vld [vmem:[%s413] sm:%s406]
                %416 = vst [vmem:[%s414] sm:%s406] %v415
                %v417 = vld [vmem:[%s413 + $0x8] sm:%s406]
                %418 = vst [vmem:[%s414 + $0x10] sm:%s406] %v417
              $region91: #{_lambda_.4} parent=85 // loop_footer
                %s412 = sadd.s32 1, %s408
              $region92: #{_lambda_.4} parent=85 // loop_footer_branch
                %407 = sbr.rel target = $region88
              $region93: #{_lambda_.4} parent=85 // loop_exit
                _
            $region86: #{_lambda_.4} parent=77 // pred_fallthru
              _
          $region78: #{_lambda_.4} parent=73 // pred_fallthru
            _
          %435 = vnop
        $region74: #{_lambda_.4} parent=65 // pred_fallthru
          _
      $region66: #{_lambda_.4} parent=5 // pred_fallthru
        _
      %p436 = scmp.le.s32.totalorder 2, %s9
      // Predicated region
      $region109: #{_lambda_.4} parent=5 // pred_check
        %p437 = pneg %p436
      $region110: #{_lambda_.4} parent=5 // pred_check_branch
        %439 = sbr.rel (%p437) target = $region112
      $region111: #{_lambda_.4} parent=5 // pred_region
        %s440 = ssub.s32 %s9, 2
        // Predicated region
        $region113: #{_lambda_.4} parent=111 // pred_check
          %p441 = pneg %p106
        $region114: #{_lambda_.4} parent=111 // pred_check_branch
          %443 = sbr.rel (%p441) target = $region116
        $region115: #{_lambda_.4} parent=111 // pred_region
          %s444 = sand.u32 %s91, 1
          %s445 = sand.u32 %s91, 1
          %s446 = smul.addr %s445, 16
          %s447 = scalar_lea.vmem [#allocation3], %s446
        $region116: #{_lambda_.4} parent=111 // pred_fallthru
          _
      $region112: #{_lambda_.4} parent=5 // pred_fallthru
        _
    $region6: #{_lambda_.4} parent=1 // loop_footer
      %s13 = sadd.s32 1, %s9
    $region7: #{_lambda_.4} parent=1 // loop_footer_branch
      %8 = sbr.rel target = $region3
    $region8: #{_lambda_.4} parent=1 // loop_exit
      _

// kernel: _lambda_.5
$region0: #{_lambda_.5}
  #allocation0 [shape = 'u32[]', space=smem, size = 0x4, offset = 0x4, fixed_abs, tag = 'smem constant byte address 0x4 - core index']
  #allocation1 [shape = 'u32[144,128]{1,0:T(1,128)}', space=vmem, size = 0x12000, scoped, tag = 'internal scratch']
  %s0 = inlined_call_operand.vmem [shape: bf16[8,336], index: 0, kind: input, shape index: {}]
  %s1 = inlined_call_operand.vmem [shape: bf16[336,32], index: 1, kind: input, shape index: {}]
  %s2 = inlined_call_operand.vmem [shape: f32[1,32], index: 2, kind: input, shape index: {}]
  %s3 = inlined_call_operand.vmem [shape: bf16[32,8], index: 3, kind: input, shape index: {}]
  %s4 = inlined_call_operand.vmem [shape: f32[1,8], index: 4, kind: input, shape index: {}]
  %s5 = inlined_call_operand.vmem [shape: f32[8,8], index: 5, kind: output, shape index: {}]
  %s6 = sld [smem:[#allocation0]]
  $region30: #{_lambda_.5} parent=0
    _
  %s8 = ssub.s32 1, %s6
  %s9 = scalar_select 0, %s8, %s6
  // Predicated region
  $region2: #{_lambda_.5} parent=0 // pred_check
    _
  $region3: #{_lambda_.5} parent=0 // pred_check_branch
    %11 = sbr.rel (0) target = $region5
  $region4: #{_lambda_.5} parent=0 // pred_region
    _
  $region5: #{_lambda_.5} parent=0 // pred_fallthru
    _
  // Predicated region
  $region6: #{_lambda_.5} parent=0 // pred_check
    _
  $region7: #{_lambda_.5} parent=0 // pred_check_branch
    %13 = sbr.rel (0) target = $region9
  $region8: #{_lambda_.5} parent=0 // pred_region
    _
  $region9: #{_lambda_.5} parent=0 // pred_fallthru
    _
  // Predicated region
  $region10: #{_lambda_.5} parent=0 // pred_check
    _
  $region11: #{_lambda_.5} parent=0 // pred_check_branch
    %15 = sbr.rel (0) target = $region13
  $region12: #{_lambda_.5} parent=0 // pred_region
    _
  $region13: #{_lambda_.5} parent=0 // pred_fallthru
    _
  // Predicated region
  $region14: #{_lambda_.5} parent=0 // pred_check
    _
  $region15: #{_lambda_.5} parent=0 // pred_check_branch
    %17 = sbr.rel (0) target = $region17
  $region16: #{_lambda_.5} parent=0 // pred_region
    _
  $region17: #{_lambda_.5} parent=0 // pred_fallthru
    _
  // Predicated region
  $region18: #{_lambda_.5} parent=0 // pred_check
    _
  $region19: #{_lambda_.5} parent=0 // pred_check_branch
    %19 = sbr.rel (0) target = $region21
  $region20: #{_lambda_.5} parent=0 // pred_region
    _
  $region21: #{_lambda_.5} parent=0 // pred_fallthru
    _
  %v21 = vld [vmem:[%s0] sm:$0xff]
  %v22 = vld [vmem:[%s0 + $0x8] sm:$0xf]
  %v23 = vld [vmem:[%s1] sm:$0xf]
  %v24 = vld [vmem:[%s1 + $0x4] sm:$0xf]
  %v25 = vld [vmem:[%s1 + $0x8] sm:$0xf]
  %v26 = vld [vmem:[%s1 + $0xc] sm:$0xf]
  %v27 = vld [vmem:[%s1 + $0x10] sm:$0xf]
  %v28 = vld [vmem:[%s1 + $0x14] sm:$0xf]
  %v29 = vld [vmem:[%s1 + $0x18] sm:$0xf]
  %v30 = vld [vmem:[%s1 + $0x1c] sm:$0xf]
  %v31 = vld [vmem:[%s1 + $0x20] sm:$0xf]
  %v32 = vld [vmem:[%s1 + $0x24] sm:$0xf]
  %v33 = vld [vmem:[%s1 + $0x28] sm:$0xf]
  %v34 = vld [vmem:[%s1 + $0x2c] sm:$0xf]
  %v35 = vld [vmem:[%s1 + $0x30] sm:$0xf]
  %v36 = vld [vmem:[%s1 + $0x34] sm:$0xf]
  %v37 = vld [vmem:[%s1 + $0x38] sm:$0xf]
  %v38 = vld [vmem:[%s1 + $0x3c] sm:$0xf]
  %v39 = vld [vmem:[%s1 + $0x40] sm:$0xf]
  %v40 = vld [vmem:[%s1 + $0x44] sm:$0xf]
  %v41 = vld [vmem:[%s1 + $0x48] sm:$0xf]
  %v42 = vld [vmem:[%s1 + $0x4c] sm:$0xf]
  %v43 = vld [vmem:[%s1 + $0x50] sm:$0xf]
  %v44 = vld [vmem:[%s1 + $0x54] sm:$0xf]
  %v45 = vld [vmem:[%s1 + $0x58] sm:$0xf]
  %v46 = vld [vmem:[%s1 + $0x5c] sm:$0xf]
  %v47 = vld [vmem:[%s1 + $0x60] sm:$0xf]
  %v48 = vld [vmem:[%s1 + $0x64] sm:$0xf]
  %v49 = vld [vmem:[%s1 + $0x68] sm:$0xf]
  %v50 = vld [vmem:[%s1 + $0x6c] sm:$0xf]
  %v51 = vld [vmem:[%s1 + $0x70] sm:$0xf]
  %v52 = vld [vmem:[%s1 + $0x74] sm:$0xf]
  %v53 = vld [vmem:[%s1 + $0x78] sm:$0xf]
  %v54 = vld [vmem:[%s1 + $0x7c] sm:$0xf]
  %v55 = vld [vmem:[%s1 + $0x80] sm:$0xf]
  %v56 = vld [vmem:[%s1 + $0x84] sm:$0xf]
  %v57 = vld [vmem:[%s1 + $0x88] sm:$0xf]
  %v58 = vld [vmem:[%s1 + $0x8c] sm:$0xf]
  %v59 = vld [vmem:[%s1 + $0x90] sm:$0xf]
  %v60 = vld [vmem:[%s1 + $0x94] sm:$0xf]
  %v61 = vld [vmem:[%s1 + $0x98] sm:$0xf]
  %v62 = vld [vmem:[%s1 + $0x9c] sm:$0xf]
  %v63 = vld [vmem:[%s1 + $0xa0] sm:$0xf]
  %v64 = vld [vmem:[%s1 + $0xa4] sm:$0xf]
  %v65 = vld [vmem:[%s2] sm:$0x1]
  %v67 = vlaneseq
  %v68 = vshrl.u32 %v67, 7
  %v69 = vsub.s32 0, %v68
  %v70 = vrot.slane %v65, %v69
  %v74 = vunpack.c.l.b16 %v21
  %v75 = vunpack.c.h.b16 %v21
  %v76 = vunpack.c.l.b16 %v22
  %v77 = vpack.c.b16 %v74, %v74
  %v78 = vpack.c.b16 %v75, %v75
  %v79 = vpack.c.b16 %v76, %v76
  %v124 = vunpack.c.l.b16 %v23
  %v125 = vunpack.c.l.b16 %v24
  %v126 = vunpack.c.l.b16 %v25
  %v127 = vunpack.c.l.b16 %v26
  %v128 = vunpack.c.l.b16 %v27
  %v129 = vunpack.c.l.b16 %v28
  %v130 = vunpack.c.l.b16 %v29
  %v131 = vunpack.c.l.b16 %v30
  %v132 = vunpack.c.l.b16 %v31
  %v133 = vunpack.c.l.b16 %v32
  %v134 = vunpack.c.l.b16 %v33
  %v135 = vunpack.c.l.b16 %v34
  %v136 = vunpack.c.l.b16 %v35
  %v137 = vunpack.c.l.b16 %v36
  %v138 = vunpack.c.l.b16 %v37
  %v139 = vunpack.c.l.b16 %v38
  %v140 = vunpack.c.l.b16 %v39
  %v141 = vunpack.c.l.b16 %v40
  %v142 = vunpack.c.l.b16 %v41
  %v143 = vunpack.c.l.b16 %v42
  %v144 = vunpack.c.l.b16 %v43
  %v145 = vunpack.c.l.b16 %v44
  %v146 = vunpack.c.l.b16 %v45
  %v147 = vunpack.c.l.b16 %v46
  %v148 = vunpack.c.l.b16 %v47
  %v149 = vunpack.c.l.b16 %v48
  %v150 = vunpack.c.l.b16 %v49
  %v151 = vunpack.c.l.b16 %v50
  %v152 = vunpack.c.l.b16 %v51
  %v153 = vunpack.c.l.b16 %v52
  %v154 = vunpack.c.l.b16 %v53
  %v155 = vunpack.c.l.b16 %v54
  %v156 = vunpack.c.l.b16 %v55
  %v157 = vunpack.c.l.b16 %v56
  %v158 = vunpack.c.l.b16 %v57
  %v159 = vunpack.c.l.b16 %v58
  %v160 = vunpack.c.l.b16 %v59
  %v161 = vunpack.c.l.b16 %v60
  %v162 = vunpack.c.l.b16 %v61
  %v163 = vunpack.c.l.b16 %v62
  %v164 = vunpack.c.l.b16 %v63
  %v165 = vunpack.c.l.b16 %v64
  %v166 = vpack.c.b16 %v125, %v124
  %v167 = vpack.c.b16 %v127, %v126
  %v168 = vpack.c.b16 %v129, %v128
  %v169 = vpack.c.b16 %v131, %v130
  %v170 = vpack.c.b16 %v133, %v132
  %v171 = vpack.c.b16 %v135, %v134
  %v172 = vpack.c.b16 %v137, %v136
  %v173 = vpack.c.b16 %v139, %v138
  %v174 = vpack.c.b16 %v141, %v140
  %v175 = vpack.c.b16 %v143, %v142
  %v176 = vpack.c.b16 %v145, %v144
  %v177 = vpack.c.b16 %v147, %v146
  %v178 = vpack.c.b16 %v149, %v148
  %v179 = vpack.c.b16 %v151, %v150
  %v180 = vpack.c.b16 %v153, %v152
  %v181 = vpack.c.b16 %v155, %v154
  %v182 = vpack.c.b16 %v157, %v156
  %v183 = vpack.c.b16 %v159, %v158
  %v184 = vpack.c.b16 %v161, %v160
  %v185 = vpack.c.b16 %v163, %v162
  %v186 = vpack.c.b16 %v165, %v164
  %vm208 = vcmask 654336
  %v210 = vsel %vm208, %v79, 0
  %212 = vmatprep.subr.bf16.mxu0 0
  %213 = vmatpush1.bf16.msra.mxu0 %v173
  %214 = vmatprep.subr.bf16.mxu0 0
  %215 = vmatpush1.bf16.msra.mxu0 %v172
  %216 = vmatprep.subr.bf16.mxu0 0
  %217 = vmatpush1.bf16.msra.mxu0 %v171
  %218 = vmatprep.subr.bf16.mxu0 0
  %219 = vmatpush1.bf16.msra.mxu0 %v170
  %220 = vmatprep.subr.bf16.mxu0 0
  %221 = vmatpush1.bf16.msra.mxu0 %v169
  %222 = vmatprep.subr.bf16.mxu0 0
  %223 = vmatpush1.bf16.msra.mxu0 %v168
  %224 = vmatprep.subr.bf16.mxu0 0
  %225 = vmatpush1.bf16.msra.mxu0 %v167
  %226 = vmatprep.subr.bf16.mxu0 0
  %227 = vmatpush1.bf16.msra.mxu0 %v166
  %228 = vmatprep.subr.bf16.mxu0 0
  %229 = vmatpush2.bf16.msra.mxu0 %v181
  %230 = vmatprep.subr.bf16.mxu0 0
  %231 = vmatpush2.bf16.msra.mxu0 %v180
  %232 = vmatprep.subr.bf16.mxu0 0
  %233 = vmatpush2.bf16.msra.mxu0 %v179
  %234 = vmatprep.subr.bf16.mxu0 0
  %235 = vmatpush2.bf16.msra.mxu0 %v178
  %236 = vmatprep.subr.bf16.mxu0 0
  %237 = vmatpush2.bf16.msra.mxu0 %v177
  %238 = vmatprep.subr.bf16.mxu0 0
  %239 = vmatpush2.bf16.msra.mxu0 %v176
  %240 = vmatprep.subr.bf16.mxu0 0
  %241 = vmatpush2.bf16.msra.mxu0 %v175
  %242 = vmatprep.subr.bf16.mxu0 0
  %243 = vmatpush2.bf16.msra.mxu0 %v174
  %244 = vmatprep.mubr.bf16.mxu0 %v78
  %245 = vmatmul.mubr.bf16.gmra.mxu0 %v77
  %v246 = vpop.f32.mrf.mxu0
  %v247 = vadd.f32 %v70, %v246
  %v248 = vpop.f32.mrf.mxu0
  %v249 = vpop.f32.mrf.mxu0
  %v250 = vpop.f32.mrf.mxu0
  %251 = vdwg.mxu0
  %252 = vmatprep.subr.bf16.mxu0 0
  %253 = vmatpush1.bf16.msra.mxu0 0
  %254 = vmatprep.subr.bf16.mxu0 0
  %255 = vmatpush1.bf16.msra.mxu0 0
  %256 = vmatprep.subr.bf16.mxu0 0
  %257 = vmatpush1.bf16.msra.mxu0 0
  %258 = vmatprep.subr.bf16.mxu0 0
  %259 = vmatpush1.bf16.msra.mxu0 %v186
  %260 = vmatprep.subr.bf16.mxu0 0
  %261 = vmatpush1.bf16.msra.mxu0 %v185
  %262 = vmatprep.subr.bf16.mxu0 0
  %263 = vmatpush1.bf16.msra.mxu0 %v184
  %264 = vmatprep.subr.bf16.mxu0 0
  %265 = vmatpush1.bf16.msra.mxu0 %v183
  %266 = vmatprep.subr.bf16.mxu0 0
  %267 = vmatpush1.bf16.msra.mxu0 %v182
  %268 = vmatprep.subr.bf16.mxu0 0
  %269 = vmatpush2.bf16.msra.mxu0 0
  %270 = vmatprep.subr.bf16.mxu0 0
  %271 = vmatpush2.bf16.msra.mxu0 0
  %272 = vmatprep.subr.bf16.mxu0 0
  %273 = vmatpush2.bf16.msra.mxu0 0
  %274 = vmatprep.subr.bf16.mxu0 0
  %275 = vmatpush2.bf16.msra.mxu0 0
  %276 = vmatprep.subr.bf16.mxu0 0
  %277 = vmatpush2.bf16.msra.mxu0 0
  %278 = vmatprep.subr.bf16.mxu0 0
  %279 = vmatpush2.bf16.msra.mxu0 0
  %280 = vmatprep.subr.bf16.mxu0 0
  %281 = vmatpush2.bf16.msra.mxu0 0
  %282 = vmatprep.subr.bf16.mxu0 0
  %283 = vmatpush2.bf16.msra.mxu0 0
  %284 = vmatprep.mubr.bf16.mxu0 0
  %285 = vmatmul.mubr.bf16.gmra.mxu0 %v210
  %v286 = vpop.f32.mrf.mxu0
  %v287 = vadd.f32 %v247, %v286
  %v288 = vpop.f32.mrf.mxu0
  %v289 = vpop.f32.mrf.mxu0
  %v290 = vpop.f32.mrf.mxu0
  %291 = vdwg.mxu0
  %vm292 = vcmp.ge.f32.partialorder %v287, 0.0
  %v293 = vmul.f32 %v287, 0.01
  %v294 = vsel %vm292, %v287, %v293
  %v295 = vpack.c.bf16 %v294, %v294
  %v296 = vld [vmem:[%s3] sm:$0xf]
  %v297 = vld [vmem:[%s3 + $0x4] sm:$0xf]
  %v298 = vld [vmem:[%s3 + $0x8] sm:$0xf]
  %v299 = vld [vmem:[%s3 + $0xc] sm:$0xf]
  %v300 = vld [vmem:[%s4] sm:$0x1]
  %v302 = vlaneseq
  %v303 = vshrl.u32 %v302, 7
  %v304 = vsub.s32 0, %v303
  %v305 = vrot.slane %v300, %v304
  %v311 = vunpack.c.l.b16 %v296
  %v312 = vunpack.c.l.b16 %v297
  %v313 = vunpack.c.l.b16 %v298
  %v314 = vunpack.c.l.b16 %v299
  %v315 = vpack.c.b16 %v312, %v311
  %v316 = vpack.c.b16 %v314, %v313
  %vm319 = vcmask 261120
  %v321 = vsel %vm319, %v295, 0
  %323 = vmatprep.subr.bf16.mxu0 0
  %324 = vmatpush1.bf16.msra.mxu0 0
  %325 = vmatprep.subr.bf16.mxu0 0
  %326 = vmatpush1.bf16.msra.mxu0 0
  %327 = vmatprep.subr.bf16.mxu0 0
  %328 = vmatpush1.bf16.msra.mxu0 0
  %329 = vmatprep.subr.bf16.mxu0 0
  %330 = vmatpush1.bf16.msra.mxu0 0
  %331 = vmatprep.subr.bf16.mxu0 0
  %332 = vmatpush1.bf16.msra.mxu0 0
  %333 = vmatprep.subr.bf16.mxu0 0
  %334 = vmatpush1.bf16.msra.mxu0 0
  %335 = vmatprep.subr.bf16.mxu0 0
  %336 = vmatpush1.bf16.msra.mxu0 %v316
  %337 = vmatprep.subr.bf16.mxu0 0
  %338 = vmatpush1.bf16.msra.mxu0 %v315
  %339 = vmatprep.subr.bf16.mxu0 0
  %340 = vmatpush2.bf16.msra.mxu0 0
  %341 = vmatprep.subr.bf16.mxu0 0
  %342 = vmatpush2.bf16.msra.mxu0 0
  %343 = vmatprep.subr.bf16.mxu0 0
  %344 = vmatpush2.bf16.msra.mxu0 0
  %345 = vmatprep.subr.bf16.mxu0 0
  %346 = vmatpush2.bf16.msra.mxu0 0
  %347 = vmatprep.subr.bf16.mxu0 0
  %348 = vmatpush2.bf16.msra.mxu0 0
  %349 = vmatprep.subr.bf16.mxu0 0
  %350 = vmatpush2.bf16.msra.mxu0 0
  %351 = vmatprep.subr.bf16.mxu0 0
  %352 = vmatpush2.bf16.msra.mxu0 0
  %353 = vmatprep.subr.bf16.mxu0 0
  %354 = vmatpush2.bf16.msra.mxu0 0
  %355 = vmatprep.mubr.bf16.mxu0 0
  %356 = vmatmul.mubr.bf16.gmra.mxu0 %v321
  %v357 = vpop.f32.mrf.mxu0
  %v358 = vadd.f32 %v305, %v357
  %v359 = vpop.f32.mrf.mxu0
  %v360 = vpop.f32.mrf.mxu0
  %v361 = vpop.f32.mrf.mxu0
  %362 = vdwg.mxu0
  %vm363 = vcmask 64512
  %364 = vst.msk [vmem:[%s5] sm:$0xff] %vm363, %v358
  // Predicated region
  $region22: #{_lambda_.5} parent=0 // pred_check
    _
  $region23: #{_lambda_.5} parent=0 // pred_check_branch
    %366 = sbr.rel (0) target = $region25
  $region24: #{_lambda_.5} parent=0 // pred_region
    _
  $region25: #{_lambda_.5} parent=0 // pred_fallthru
    _
  // Predicated region
  $region26: #{_lambda_.5} parent=0 // pred_check
    _
  $region27: #{_lambda_.5} parent=0 // pred_check_branch
    %368 = sbr.rel (0) target = $region29
  $region28: #{_lambda_.5} parent=0 // pred_region
    _
  $region29: #{_lambda_.5} parent=0 // pred_fallthru
    _

</llo_original>
